<compile_context>
chip_gen: v6e
topology: v6e:2x2x1
jax: 0.10.0
libtpu: 0.0.40
codegen_flags: <defaults>
</compile_context>

<pallas_src>
import math

import jax
import jax.numpy as jnp
import numpy as np
from jax.experimental import pallas as pl
from jax.experimental.pallas import tpu as pltpu

# ---------------------------------------------------------------------------
# Configuration (scaled, self-consistent; see NOTE above).
# ---------------------------------------------------------------------------
B = 8                  # batch (fills all 8 sublanes of a vreg)
INPUT_SIZE = 8         # signal length L
NUM_KERNELS = 8        # conv output channels (scaled down from 24)
KEY_SIZE = 16          # key feature width (scaled down from 100)
K1, K2, K3 = 6, 3, 2   # conv kernel sizes (scaled 192:96:64 -> 6:3:2)
OUT = 100              # fc output features (as in the module)
LANES = 128
OUT_PAD = 128          # lane-dense output width (sliced back to OUT outside)

L1 = INPUT_SIZE - K1 + 1          # 3
L2 = INPUT_SIZE - K2 + 1          # 6
L3 = INPUT_SIZE - K3 + 1          # 7

PS_SIZE = INPUT_SIZE // 2 + 1     # power_spectrum_size = 5
NFFT = PS_SIZE * 2 - 2            # 8
HOP = NFFT // 4                   # 2 (torch.stft default hop)
PAD = NFFT // 2                   # 4 (center=True reflect padding)
F_BINS = NFFT // 2 + 1            # 5 onesided frequency bins
T_FRAMES = 1 + INPUT_SIZE // HOP  # 5 STFT frames (== PS_SIZE -> fc consistent)

FC_IN = 3 * NUM_KERNELS + PS_SIZE + KEY_SIZE   # 24 + 5 + 16 = 45
NEG_SLOPE = 0.01                               # F.leaky_relu default

# Feature-column layout inside the 128-lane feature row (matches torch.cat order)
C1_COL, C2_COL, C3_COL = 0, NUM_KERNELS, 2 * NUM_KERNELS   # 0, 8, 16
PS_COL = 3 * NUM_KERNELS                                   # 24
KEY_COL = PS_COL + PS_SIZE                                 # 29
ONES_COL = FC_IN                                           # 45 (fc bias row)

# Activation-slab row layout (all chunk starts are multiples of 8)
X1_R, X2_R, X3_R = 0, B * L1, B * (L1 + L2)                # 0, 24, 72
NX = B * (L1 + L2 + L3)                                    # 128 conv-frame rows
S_R = NX                                                   # 128 : STFT rows
KF_R = S_R + B                                             # 136 : key (+ ones)
R_ACT = KF_R + B                                           # 144

# Disjoint tap-column ranges per conv branch (last column of each = ones/bias)
T1_C = 0
T2_C = K1 + 1            # 7
T3_C = T2_C + K2 + 1     # 11

# Parameter-slab row layout (all chunk starts are multiples of 8)
WALL_R = 0               # fused conv weights+biases      (128 rows)
AALL_R = WALL_R + 128    # block time-averaging matrix    (8 rows)
DCOS_R = AALL_R + 8      # block-diagonal DFT cos         (128 rows)
DSIN_R = DCOS_R + 128    # block-diagonal DFT sin         (128 rows)
MAVG_R = DSIN_R + 128    # freq-averaging / ps scatter    (128 rows)
FCW_R = MAVG_R + 128     # fc weight^T + bias row         (128 rows)
R_PRM = FCW_R + 128      # 648


# ---------------------------------------------------------------------------
# Pallas kernel: whole forward pass = 6 lane-dense matmuls + leaky + sqrt.
# ---------------------------------------------------------------------------
def ecg_kernel(act_ref, prm_ref, out_ref):
    x_fr = act_ref[0:NX, :]              # (128,128) im2col frames, 3 branches
    s_fr = act_ref[S_R:S_R + B, :]       # (8,128)   STFT frames (T*NFFT cols)
    keyf = act_ref[KF_R:KF_R + B, :]     # (8,128)   key @ cols 29:45, 1 @ col 45

    w_all = prm_ref[WALL_R:WALL_R + 128, :]   # fused conv weights + biases
    a_all = prm_ref[AALL_R:AALL_R + B, :]     # 1/L block averaging
    dcos = prm_ref[DCOS_R:DCOS_R + 128, :]
    dsin = prm_ref[DSIN_R:DSIN_R + 128, :]
    mavg = prm_ref[MAVG_R:MAVG_R + 128, :]    # 1/F averaging -> ps columns
    fcw = prm_ref[FCW_R:FCW_R + 128, :]       # fc_w^T (+ bias row at ONES_COL)

    # All 3 conv branches + biases in one matmul; leaky; mean-over-time matmul.
    y = jnp.dot(x_fr, w_all, preferred_element_type=jnp.float32)
    y = jnp.where(y >= 0, y, NEG_SLOPE * y)
    conv_feats = jnp.dot(a_all, y, preferred_element_type=jnp.float32)  # (8,128)

    # STFT magnitude via block-diagonal real DFT; mean over freq via matmul.
    re = jnp.dot(s_fr, dcos, preferred_element_type=jnp.float32)
    im = jnp.dot(s_fr, dsin, preferred_element_type=jnp.float32)
    mag = jnp.sqrt(re * re + im * im)                                   # (8,128)
    ps_feats = jnp.dot(mag, mavg, preferred_element_type=jnp.float32)   # (8,128)

    # Feature row: disjoint column ranges -> plain adds; fc bias via ones col.
    feat = conv_feats + ps_feats + keyf                                 # (8,128)
    out_ref[...] = jnp.dot(feat, fcw,
                           preferred_element_type=jnp.float32).astype(out_ref.dtype)


_COST = pl.CostEstimate(
    flops=2 * 128 * 128 * 128 + 5 * (2 * B * 128 * 128),
    transcendentals=B * 128,
    bytes_accessed=(R_ACT + R_PRM + B) * LANES * 4,
)

_VMEM = pl.BlockSpec(memory_space=pltpu.MemorySpace.VMEM)


def forward_pallas(act_slab, prm_slab):
    out_pad = pl.pallas_call(
        ecg_kernel,
        out_shape=jax.ShapeDtypeStruct((B, OUT_PAD), jnp.float32),
        in_specs=[_VMEM, _VMEM],
        out_specs=_VMEM,
        cost_estimate=_COST,
    )(act_slab, prm_slab)
    return out_pad[:, :OUT]          # padded fc columns are exactly zero


# ---------------------------------------------------------------------------
# Host-side packing: activations slab (per call, fused under jit) and the
# constant params slab (built once in numpy).
# ---------------------------------------------------------------------------
def build_act_slab(x2d, key_feat):
    def frames(ksize, lout):
        idx = jnp.arange(lout)[:, None] + jnp.arange(ksize)[None, :]
        return x2d[:, idx].reshape(B * lout, ksize)      # row = i*lout + t

    act = jnp.zeros((R_ACT, LANES), jnp.float32)
    act = act.at[X1_R:X1_R + B * L1, T1_C:T1_C + K1].set(frames(K1, L1))
    act = act.at[X1_R:X1_R + B * L1, T1_C + K1].set(1.0)
    act = act.at[X2_R:X2_R + B * L2, T2_C:T2_C + K2].set(frames(K2, L2))
    act = act.at[X2_R:X2_R + B * L2, T2_C + K2].set(1.0)
    act = act.at[X3_R:X3_R + B * L3, T3_C:T3_C + K3].set(frames(K3, L3))
    act = act.at[X3_R:X3_R + B * L3, T3_C + K3].set(1.0)

    # torch.stft(center=True, reflect pad, rectangular window) frames, laid out
    # per-batch-row as T_FRAMES consecutive length-NFFT windows along lanes.
    xp = jnp.pad(x2d, ((0, 0), (PAD, PAD)), mode="reflect")
    idx = jnp.arange(T_FRAMES)[:, None] * HOP + jnp.arange(NFFT)[None, :]
    sf = xp[:, idx].reshape(B, T_FRAMES * NFFT)
    act = act.at[S_R:S_R + B, 0:T_FRAMES * NFFT].set(sf)

    # Key features pre-placed at their fc columns; ones column for fc bias.
    act = act.at[KF_R:KF_R + B, KEY_COL:KEY_COL + KEY_SIZE].set(key_feat)
    act = act.at[KF_R:KF_R + B, ONES_COL].set(1.0)
    return act


@jax.jit
def forward(x, key_feat, prm_slab):
    """End-to-end forward: packing + Pallas kernel + un-pad, one XLA program."""
    act_slab = build_act_slab(x[:, 0, :], key_feat)
    return forward_pallas(act_slab, prm_slab)


def build_prm_slab(p):
    prm = np.zeros((R_PRM, LANES), np.float32)

    def place_conv(w, b, tap_col, out_col, ksize):
        w2 = np.asarray(w)[:, 0, :]                              # (NK, K)
        prm[WALL_R + tap_col:WALL_R + tap_col + ksize,
            out_col:out_col + NUM_KERNELS] = w2.T
        prm[WALL_R + tap_col + ksize,
            out_col:out_col + NUM_KERNELS] = np.asarray(b)       # bias row

    place_conv(p["w1"], p["b1"], T1_C, C1_COL, K1)
    place_conv(p["w2"], p["b2"], T2_C, C2_COL, K2)
    place_conv(p["w3"], p["b3"], T3_C, C3_COL, K3)

    # Block-diagonal per-sample time-averaging (folds the 1/L scale).
    for i in range(B):
        prm[AALL_R + i, X1_R + i * L1:X1_R + (i + 1) * L1] = 1.0 / L1
        prm[AALL_R + i, X2_R + i * L2:X2_R + (i + 1) * L2] = 1.0 / L2
        prm[AALL_R + i, X3_R + i * L3:X3_R + (i + 1) * L3] = 1.0 / L3

    # Block-diagonal real-DFT basis (one block per STFT frame) and the
    # frequency-averaging matrix that also scatters ps into its fc columns.
    n = np.arange(NFFT)[:, None].astype(np.float32)
    f = np.arange(F_BINS)[None, :].astype(np.float32)
    ang = 2.0 * np.pi * n * f / NFFT
    cosb, sinb = np.cos(ang).astype(np.float32), np.sin(ang).astype(np.float32)
    for t in range(T_FRAMES):
        prm[DCOS_R + t * NFFT:DCOS_R + (t + 1) * NFFT,
            t * F_BINS:(t + 1) * F_BINS] = cosb
        prm[DSIN_R + t * NFFT:DSIN_R + (t + 1) * NFFT,
            t * F_BINS:(t + 1) * F_BINS] = sinb
        prm[MAVG_R + t * F_BINS:MAVG_R + (t + 1) * F_BINS, PS_COL + t] = 1.0 / F_BINS

    # fc weight (transposed, zero-padded to 128x128) with bias folded as a row.
    prm[FCW_R:FCW_R + FC_IN, 0:OUT] = np.asarray(p["fc_w"]).T
    prm[FCW_R + ONES_COL, 0:OUT] = np.asarray(p["fc_b"])
    return jnp.asarray(prm)


def init_params(rng):
    ks = jax.random.split(rng, 5)

    def conv_init(k, ksize):
        bound = 1.0 / math.sqrt(ksize)
        w = jax.random.uniform(k, (NUM_KERNELS, 1, ksize), jnp.float32, -bound, bound)
        b = jax.random.uniform(jax.random.fold_in(k, 1), (NUM_KERNELS,),
                               jnp.float32, -bound, bound)
        return w, b

    w1, b1 = conv_init(ks[0], K1)
    w2, b2 = conv_init(ks[1], K2)
    w3, b3 = conv_init(ks[2], K3)
    fbound = 1.0 / math.sqrt(FC_IN)
    fc_w = jax.random.uniform(ks[3], (OUT, FC_IN), jnp.float32, -fbound, fbound)
    fc_b = jax.random.uniform(ks[4], (OUT,), jnp.float32, -fbound, fbound)
    return dict(w1=w1, b1=b1, w2=w2, b2=b2, w3=w3, b3=b3, fc_w=fc_w, fc_b=fc_b)


# ---------------------------------------------------------------------------
# Pure-JAX reference (mirrors the PyTorch forward, STFT via rfft).
# ---------------------------------------------------------------------------
def reference_forward(x, key_feat, p):
    lr = lambda v: jnp.where(v >= 0, v, NEG_SLOPE * v)
    x2d = x[:, 0, :]

    def conv1d(w, b, ksize):
        lout = INPUT_SIZE - ksize + 1
        idx = jnp.arange(lout)[:, None] + jnp.arange(ksize)[None, :]
        frames = x2d[:, idx]                                    # (B, lout, K)
        return jnp.einsum("blk,nk->bnl", frames, w[:, 0, :]) + b[None, :, None]

    c1 = lr(conv1d(p["w1"], p["b1"], K1)).mean(axis=-1)
    c2 = lr(conv1d(p["w2"], p["b2"], K2)).mean(axis=-1)
    c3 = lr(conv1d(p["w3"], p["b3"], K3)).mean(axis=-1)

    xp = jnp.pad(x2d, ((0, 0), (PAD, PAD)), mode="reflect")
    idx = jnp.arange(T_FRAMES)[:, None] * HOP + jnp.arange(NFFT)[None, :]
    frames = xp[:, idx]                                         # (B, T, NFFT)
    mag = jnp.abs(jnp.fft.rfft(frames, axis=-1))                # (B, T, F)
    ps = mag.mean(axis=-1)                                      # mean over freq

    feats = jnp.concatenate([c1, c2, c3, ps, key_feat], axis=1)
    return feats @ p["fc_w"].T + p["fc_b"][None, :]


# ---------------------------------------------------------------------------
if __name__ == "__main__":
    rng = jax.random.PRNGKey(0)
    kx, kk, kp = jax.random.split(rng, 3)

    x = jax.random.normal(kx, (B, 1, INPUT_SIZE), jnp.float32)    # ECG (B,1,L)
    key_feat = jax.random.normal(kk, (B, KEY_SIZE), jnp.float32)  # key (B,ks)
    params = init_params(kp)

    prm_slab = build_prm_slab(params)                             # constant slab

    out = forward(x, key_feat, prm_slab)
    out = jax.block_until_ready(out)

    ref = jax.block_until_ready(reference_forward(x, key_feat, params))
    np.testing.assert_allclose(np.asarray(out), np.asarray(ref), rtol=1e-3, atol=1e-4)

    print("KERNEL_OK")
</pallas_src>

<mosaic_0001>
module attributes {stable_mosaic.version = 11 : i64} {
  func.func @ecg_kernel(%arg0: memref<144x128xf32, #tpu.memory_space<vmem>>, %arg1: memref<648x128xf32, #tpu.memory_space<vmem>>, %arg2: memref<8x128xf32, #tpu.memory_space<vmem>>) attributes {dimension_semantics = [], scalar_prefetch = 0 : i64, scratch_operands = 0 : i64, tpu.core_type = #tpu.core_type<tc>} {
    %c0 = arith.constant 0 : index
    %c0_0 = arith.constant 0 : index
    %0 = vector.load %arg0[%c0, %c0_0] : memref<144x128xf32, #tpu.memory_space<vmem>>, vector<128x128xf32>
    %c128 = arith.constant 128 : index
    %c0_1 = arith.constant 0 : index
    %1 = vector.load %arg0[%c128, %c0_1] : memref<144x128xf32, #tpu.memory_space<vmem>>, vector<8x128xf32>
    %c136 = arith.constant 136 : index
    %c0_2 = arith.constant 0 : index
    %2 = vector.load %arg0[%c136, %c0_2] : memref<144x128xf32, #tpu.memory_space<vmem>>, vector<8x128xf32>
    %c0_3 = arith.constant 0 : index
    %c0_4 = arith.constant 0 : index
    %3 = vector.load %arg1[%c0_3, %c0_4] : memref<648x128xf32, #tpu.memory_space<vmem>>, vector<128x128xf32>
    %c128_5 = arith.constant 128 : index
    %c0_6 = arith.constant 0 : index
    %4 = vector.load %arg1[%c128_5, %c0_6] : memref<648x128xf32, #tpu.memory_space<vmem>>, vector<8x128xf32>
    %c136_7 = arith.constant 136 : index
    %c0_8 = arith.constant 0 : index
    %5 = vector.load %arg1[%c136_7, %c0_8] : memref<648x128xf32, #tpu.memory_space<vmem>>, vector<128x128xf32>
    %c264 = arith.constant 264 : index
    %c0_9 = arith.constant 0 : index
    %6 = vector.load %arg1[%c264, %c0_9] : memref<648x128xf32, #tpu.memory_space<vmem>>, vector<128x128xf32>
    %c392 = arith.constant 392 : index
    %c0_10 = arith.constant 0 : index
    %7 = vector.load %arg1[%c392, %c0_10] : memref<648x128xf32, #tpu.memory_space<vmem>>, vector<128x128xf32>
    %c520 = arith.constant 520 : index
    %c0_11 = arith.constant 0 : index
    %8 = vector.load %arg1[%c520, %c0_11] : memref<648x128xf32, #tpu.memory_space<vmem>>, vector<128x128xf32>
    %cst = arith.constant dense<0.000000e+00> : vector<128x128xf32>
    %9 = tpu.matmul %0, %3, %cst {dimension_numbers = #tpu.dot_dimension_numbers<[1], [0], [0], [1], [0, 0, 1, 1], [], []>} : vector<128x128xf32>, vector<128x128xf32>, vector<128x128xf32> -> vector<128x128xf32>
    %cst_12 = arith.constant 0.000000e+00 : f32
    %10 = vector.broadcast %cst_12 : f32 to vector<128x128xf32>
    %11 = arith.cmpf oge, %9, %10 : vector<128x128xf32>
    %cst_13 = arith.constant 0.00999999977 : f32
    %12 = vector.broadcast %cst_13 : f32 to vector<128x128xf32>
    %13 = arith.mulf %12, %9 : vector<128x128xf32>
    %14 = arith.select %11, %9, %13 : vector<128x128xi1>, vector<128x128xf32>
    %cst_14 = arith.constant dense<0.000000e+00> : vector<8x128xf32>
    %15 = tpu.matmul %4, %14, %cst_14 {dimension_numbers = #tpu.dot_dimension_numbers<[1], [0], [0], [1], [0, 0, 1, 1], [], []>} : vector<8x128xf32>, vector<128x128xf32>, vector<8x128xf32> -> vector<8x128xf32>
    %cst_15 = arith.constant dense<0.000000e+00> : vector<8x128xf32>
    %16 = tpu.matmul %1, %5, %cst_15 {dimension_numbers = #tpu.dot_dimension_numbers<[1], [0], [0], [1], [0, 0, 1, 1], [], []>} : vector<8x128xf32>, vector<128x128xf32>, vector<8x128xf32> -> vector<8x128xf32>
    %cst_16 = arith.constant dense<0.000000e+00> : vector<8x128xf32>
    %17 = tpu.matmul %1, %6, %cst_16 {dimension_numbers = #tpu.dot_dimension_numbers<[1], [0], [0], [1], [0, 0, 1, 1], [], []>} : vector<8x128xf32>, vector<128x128xf32>, vector<8x128xf32> -> vector<8x128xf32>
    %18 = arith.mulf %16, %16 : vector<8x128xf32>
    %19 = arith.mulf %17, %17 : vector<8x128xf32>
    %20 = arith.addf %18, %19 : vector<8x128xf32>
    %21 = math.sqrt %20 : vector<8x128xf32>
    %cst_17 = arith.constant dense<0.000000e+00> : vector<8x128xf32>
    %22 = tpu.matmul %21, %7, %cst_17 {dimension_numbers = #tpu.dot_dimension_numbers<[1], [0], [0], [1], [0, 0, 1, 1], [], []>} : vector<8x128xf32>, vector<128x128xf32>, vector<8x128xf32> -> vector<8x128xf32>
    %23 = arith.addf %15, %22 : vector<8x128xf32>
    %24 = arith.addf %23, %2 : vector<8x128xf32>
    %cst_18 = arith.constant dense<0.000000e+00> : vector<8x128xf32>
    %25 = tpu.matmul %24, %8, %cst_18 {dimension_numbers = #tpu.dot_dimension_numbers<[1], [0], [0], [1], [0, 0, 1, 1], [], []>} : vector<8x128xf32>, vector<128x128xf32>, vector<8x128xf32> -> vector<8x128xf32>
    %c0_19 = arith.constant 0 : index
    %c0_20 = arith.constant 0 : index
    %26 = vector.load %arg2[%c0_19, %c0_20] : memref<8x128xf32, #tpu.memory_space<vmem>>, vector<8x128xf32>
    tpu.vector_store %arg2[%c0_19, %c0_20], %25 {strides = array<i32>} : memref<8x128xf32, #tpu.memory_space<vmem>>, vector<8x128xf32>,
    return
  }
}

</mosaic_0001>

<llo_original>
// kernel: forward.1
$region0: #{forward.1}
  #allocation0 [shape = 'u32[]', space=smem, size = 0x4, offset = 0x4, fixed_abs, tag = 'smem constant byte address 0x4 - core index']
  #allocation1 [shape = 'u32[144,128]{1,0:T(1,128)}', space=vmem, size = 0x12000, scoped, tag = 'internal scratch']
  %s0 = inlined_call_operand.vmem [shape: f32[144,128], index: 0, kind: input, shape index: {}]
  %s1 = inlined_call_operand.vmem [shape: f32[648,128], index: 1, kind: input, shape index: {}]
  %s2 = inlined_call_operand.hbm [shape: f32[8,128], index: 2, kind: output, shape index: {}]
  %s3 = sld [smem:[#allocation0]]
  $region18: #{forward.1} parent=0
    _
  %s5 = ssub.s32 1, %s3
  %s6 = scalar_select 0, %s5, %s3
  $region1: #{forward.1} parent=0
    #allocation2 [shape = 'u8[4096]{0}', space=vmem, size = 0x1000, scoped, tag = 'output window, operand 0, single buffered']
    #allocation3 [shape = 's32[1]{0}', space=sflag, size = 0x4, scoped, tag = 'scoped memory for forward.1']
    %7 = vsyncpa [#allocation3], 0
    // Predicated region
    $region2: #{forward.1} parent=1 // pred_check
      _
    $region3: #{forward.1} parent=1 // pred_check_branch
      %9 = sbr.rel (0) target = $region5
    $region4: #{forward.1} parent=1 // pred_region
      _
    $region5: #{forward.1} parent=1 // pred_fallthru
      _
    // Predicated region
    $region6: #{forward.1} parent=1 // pred_check
      _
    $region7: #{forward.1} parent=1 // pred_check_branch
      %11 = sbr.rel (0) target = $region9
    $region8: #{forward.1} parent=1 // pred_region
      _
    $region9: #{forward.1} parent=1 // pred_fallthru
      _
    %v12 = vld [vmem:[%s0] sm:$0xff]
    %v13 = vld [vmem:[%s0 + $0x8] sm:$0xff]
    %v14 = vld [vmem:[%s0 + $0x10] sm:$0xff]
    %v15 = vld [vmem:[%s0 + $0x18] sm:$0xff]
    %v16 = vld [vmem:[%s0 + $0x20] sm:$0xff]
    %v17 = vld [vmem:[%s0 + $0x28] sm:$0xff]
    %v18 = vld [vmem:[%s0 + $0x30] sm:$0xff]
    %v19 = vld [vmem:[%s0 + $0x38] sm:$0xff]
    %v20 = vld [vmem:[%s0 + $0x40] sm:$0xff]
    %v21 = vld [vmem:[%s0 + $0x48] sm:$0xff]
    %v22 = vld [vmem:[%s0 + $0x50] sm:$0xff]
    %v23 = vld [vmem:[%s0 + $0x58] sm:$0xff]
    %v24 = vld [vmem:[%s0 + $0x60] sm:$0xff]
    %v25 = vld [vmem:[%s0 + $0x68] sm:$0xff]
    %v26 = vld [vmem:[%s0 + $0x70] sm:$0xff]
    %v27 = vld [vmem:[%s0 + $0x78] sm:$0xff]
    %v28 = vld [vmem:[%s0 + $0x80] sm:$0xff]
    %v29 = vld [vmem:[%s0 + $0x88] sm:$0xff]
    %v30 = vld [vmem:[%s1] sm:$0xff]
    %v31 = vld [vmem:[%s1 + $0x8] sm:$0xff]
    %v32 = vld [vmem:[%s1 + $0x10] sm:$0xff]
    %v33 = vld [vmem:[%s1 + $0x18] sm:$0xff]
    %v34 = vld [vmem:[%s1 + $0x20] sm:$0xff]
    %v35 = vld [vmem:[%s1 + $0x28] sm:$0xff]
    %v36 = vld [vmem:[%s1 + $0x30] sm:$0xff]
    %v37 = vld [vmem:[%s1 + $0x38] sm:$0xff]
    %v38 = vld [vmem:[%s1 + $0x40] sm:$0xff]
    %v39 = vld [vmem:[%s1 + $0x48] sm:$0xff]
    %v40 = vld [vmem:[%s1 + $0x50] sm:$0xff]
    %v41 = vld [vmem:[%s1 + $0x58] sm:$0xff]
    %v42 = vld [vmem:[%s1 + $0x60] sm:$0xff]
    %v43 = vld [vmem:[%s1 + $0x68] sm:$0xff]
    %v44 = vld [vmem:[%s1 + $0x70] sm:$0xff]
    %v45 = vld [vmem:[%s1 + $0x78] sm:$0xff]
    %v46 = vld [vmem:[%s1 + $0x80] sm:$0xff]
    %v47 = vld [vmem:[%s1 + $0x88] sm:$0xff]
    %v48 = vld [vmem:[%s1 + $0x90] sm:$0xff]
    %v49 = vld [vmem:[%s1 + $0x98] sm:$0xff]
    %v50 = vld [vmem:[%s1 + $0xa0] sm:$0xff]
    %v51 = vld [vmem:[%s1 + $0xa8] sm:$0xff]
    %v52 = vld [vmem:[%s1 + $0xb0] sm:$0xff]
    %v53 = vld [vmem:[%s1 + $0xb8] sm:$0xff]
    %v54 = vld [vmem:[%s1 + $0xc0] sm:$0xff]
    %v55 = vld [vmem:[%s1 + $0xc8] sm:$0xff]
    %v56 = vld [vmem:[%s1 + $0xd0] sm:$0xff]
    %v57 = vld [vmem:[%s1 + $0xd8] sm:$0xff]
    %v58 = vld [vmem:[%s1 + $0xe0] sm:$0xff]
    %v59 = vld [vmem:[%s1 + $0xe8] sm:$0xff]
    %v60 = vld [vmem:[%s1 + $0xf0] sm:$0xff]
    %v61 = vld [vmem:[%s1 + $0xf8] sm:$0xff]
    %v62 = vld [vmem:[%s1 + $0x100] sm:$0xff]
    %v63 = vld [vmem:[%s1 + $0x108] sm:$0xff]
    %v64 = vld [vmem:[%s1 + $0x110] sm:$0xff]
    %v65 = vld [vmem:[%s1 + $0x118] sm:$0xff]
    %v66 = vld [vmem:[%s1 + $0x120] sm:$0xff]
    %v67 = vld [vmem:[%s1 + $0x128] sm:$0xff]
    %v68 = vld [vmem:[%s1 + $0x130] sm:$0xff]
    %v69 = vld [vmem:[%s1 + $0x138] sm:$0xff]
    %v70 = vld [vmem:[%s1 + $0x140] sm:$0xff]
    %v71 = vld [vmem:[%s1 + $0x148] sm:$0xff]
    %v72 = vld [vmem:[%s1 + $0x150] sm:$0xff]
    %v73 = vld [vmem:[%s1 + $0x158] sm:$0xff]
    %v74 = vld [vmem:[%s1 + $0x160] sm:$0xff]
    %v75 = vld [vmem:[%s1 + $0x168] sm:$0xff]
    %v76 = vld [vmem:[%s1 + $0x170] sm:$0xff]
    %v77 = vld [vmem:[%s1 + $0x178] sm:$0xff]
    %v78 = vld [vmem:[%s1 + $0x180] sm:$0xff]
    %v79 = vld [vmem:[%s1 + $0x188] sm:$0xff]
    %v80 = vld [vmem:[%s1 + $0x190] sm:$0xff]
    %v81 = vld [vmem:[%s1 + $0x198] sm:$0xff]
    %v82 = vld [vmem:[%s1 + $0x1a0] sm:$0xff]
    %v83 = vld [vmem:[%s1 + $0x1a8] sm:$0xff]
    %v84 = vld [vmem:[%s1 + $0x1b0] sm:$0xff]
    %v85 = vld [vmem:[%s1 + $0x1b8] sm:$0xff]
    %v86 = vld [vmem:[%s1 + $0x1c0] sm:$0xff]
    %v87 = vld [vmem:[%s1 + $0x1c8] sm:$0xff]
    %v88 = vld [vmem:[%s1 + $0x1d0] sm:$0xff]
    %v89 = vld [vmem:[%s1 + $0x1d8] sm:$0xff]
    %v90 = vld [vmem:[%s1 + $0x1e0] sm:$0xff]
    %v91 = vld [vmem:[%s1 + $0x1e8] sm:$0xff]
    %v92 = vld [vmem:[%s1 + $0x1f0] sm:$0xff]
    %v93 = vld [vmem:[%s1 + $0x1f8] sm:$0xff]
    %v94 = vld [vmem:[%s1 + $0x200] sm:$0xff]
    %v95 = vld [vmem:[%s1 + $0x208] sm:$0xff]
    %v96 = vld [vmem:[%s1 + $0x210] sm:$0xff]
    %v97 = vld [vmem:[%s1 + $0x218] sm:$0xff]
    %v98 = vld [vmem:[%s1 + $0x220] sm:$0xff]
    %v99 = vld [vmem:[%s1 + $0x228] sm:$0xff]
    %v100 = vld [vmem:[%s1 + $0x230] sm:$0xff]
    %v101 = vld [vmem:[%s1 + $0x238] sm:$0xff]
    %v102 = vld [vmem:[%s1 + $0x240] sm:$0xff]
    %v103 = vld [vmem:[%s1 + $0x248] sm:$0xff]
    %v104 = vld [vmem:[%s1 + $0x250] sm:$0xff]
    %v105 = vld [vmem:[%s1 + $0x258] sm:$0xff]
    %v106 = vld [vmem:[%s1 + $0x260] sm:$0xff]
    %v107 = vld [vmem:[%s1 + $0x268] sm:$0xff]
    %v108 = vld [vmem:[%s1 + $0x270] sm:$0xff]
    %v109 = vld [vmem:[%s1 + $0x278] sm:$0xff]
    %v110 = vld [vmem:[%s1 + $0x280] sm:$0xff]
    %111 = vmatprep.subr.mxu0 0.0
    %112 = vmatpush1.msra.mxu0 %v45
    %113 = vmatprep.subr.mxu0 0.0
    %114 = vmatpush1.msra.mxu0 %v44
    %115 = vmatprep.subr.mxu0 0.0
    %116 = vmatpush1.msra.mxu0 %v43
    %117 = vmatprep.subr.mxu0 0.0
    %118 = vmatpush1.msra.mxu0 %v42
    %119 = vmatprep.subr.mxu0 0.0
    %120 = vmatpush1.msra.mxu0 %v41
    %121 = vmatprep.subr.mxu0 0.0
    %122 = vmatpush1.msra.mxu0 %v40
    %123 = vmatprep.subr.mxu0 0.0
    %124 = vmatpush1.msra.mxu0 %v39
    %125 = vmatprep.subr.mxu0 0.0
    %126 = vmatpush1.msra.mxu0 %v38
    %127 = vmatprep.subr.mxu0 0.0
    %128 = vmatpush1.msra.mxu0 %v37
    %129 = vmatprep.subr.mxu0 0.0
    %130 = vmatpush1.msra.mxu0 %v36
    %131 = vmatprep.subr.mxu0 0.0
    %132 = vmatpush1.msra.mxu0 %v35
    %133 = vmatprep.subr.mxu0 0.0
    %134 = vmatpush1.msra.mxu0 %v34
    %135 = vmatprep.subr.mxu0 0.0
    %136 = vmatpush1.msra.mxu0 %v33
    %137 = vmatprep.subr.mxu0 0.0
    %138 = vmatpush1.msra.mxu0 %v32
    %139 = vmatprep.subr.mxu0 0.0
    %140 = vmatpush1.msra.mxu0 %v31
    %141 = vmatprep.subr.mxu0 0.0
    %142 = vmatpush1.msra.mxu0 %v30
    %143 = vmatprep.subr.mxu0 0.0
    %144 = vmatpush2.msra.mxu0 0.0
    %145 = vmatprep.subr.mxu0 0.0
    %146 = vmatpush2.msra.mxu0 0.0
    %147 = vmatprep.subr.mxu0 0.0
    %148 = vmatpush2.msra.mxu0 0.0
    %149 = vmatprep.subr.mxu0 0.0
    %150 = vmatpush2.msra.mxu0 0.0
    %151 = vmatprep.subr.mxu0 0.0
    %152 = vmatpush2.msra.mxu0 0.0
    %153 = vmatprep.subr.mxu0 0.0
    %154 = vmatpush2.msra.mxu0 0.0
    %155 = vmatprep.subr.mxu0 0.0
    %156 = vmatpush2.msra.mxu0 0.0
    %157 = vmatprep.subr.mxu0 0.0
    %158 = vmatpush2.msra.mxu0 0.0
    %159 = vmatprep.subr.mxu0 0.0
    %160 = vmatpush2.msra.mxu0 0.0
    %161 = vmatprep.subr.mxu0 0.0
    %162 = vmatpush2.msra.mxu0 0.0
    %163 = vmatprep.subr.mxu0 0.0
    %164 = vmatpush2.msra.mxu0 0.0
    %165 = vmatprep.subr.mxu0 0.0
    %166 = vmatpush2.msra.mxu0 0.0
    %167 = vmatprep.subr.mxu0 0.0
    %168 = vmatpush2.msra.mxu0 0.0
    %169 = vmatprep.subr.mxu0 0.0
    %170 = vmatpush2.msra.mxu0 0.0
    %171 = vmatprep.subr.mxu0 0.0
    %172 = vmatpush2.msra.mxu0 0.0
    %173 = vmatprep.subr.mxu0 0.0
    %174 = vmatpush2.msra.mxu0 0.0
    %175 = vmatprep.mubr.f32.mxu0 0.0
    %176 = vmatmul.mubr.f32.gmra.mxu0 %v12
    %v177 = vpop.f32.mrf.mxu0
    %v178 = vadd.f32 0.0, %v177
    %v179 = vpop.f32.mrf.mxu0
    %180 = vmatprep.mubr.f32.mxu0 0.0
    %181 = vmatmul.mubr.f32.gmra.mxu0 %v13
    %v182 = vpop.f32.mrf.mxu0
    %v183 = vadd.f32 0.0, %v182
    %v184 = vpop.f32.mrf.mxu0
    %185 = vmatprep.mubr.f32.mxu0 0.0
    %186 = vmatmul.mubr.f32.gmra.mxu0 %v14
    %v187 = vpop.f32.mrf.mxu0
    %v188 = vadd.f32 0.0, %v187
    %v189 = vpop.f32.mrf.mxu0
    %190 = vmatprep.mubr.f32.mxu0 0.0
    %191 = vmatmul.mubr.f32.gmra.mxu0 %v15
    %v192 = vpop.f32.mrf.mxu0
    %v193 = vadd.f32 0.0, %v192
    %v194 = vpop.f32.mrf.mxu0
    %195 = vmatprep.mubr.f32.mxu0 0.0
    %196 = vmatmul.mubr.f32.gmra.mxu0 %v16
    %v197 = vpop.f32.mrf.mxu0
    %v198 = vadd.f32 0.0, %v197
    %v199 = vpop.f32.mrf.mxu0
    %200 = vmatprep.mubr.f32.mxu0 0.0
    %201 = vmatmul.mubr.f32.gmra.mxu0 %v17
    %v202 = vpop.f32.mrf.mxu0
    %v203 = vadd.f32 0.0, %v202
    %v204 = vpop.f32.mrf.mxu0
    %205 = vmatprep.mubr.f32.mxu0 0.0
    %206 = vmatmul.mubr.f32.gmra.mxu0 %v18
    %v207 = vpop.f32.mrf.mxu0
    %v208 = vadd.f32 0.0, %v207
    %v209 = vpop.f32.mrf.mxu0
    %210 = vmatprep.mubr.f32.mxu0 0.0
    %211 = vmatmul.mubr.f32.gmra.mxu0 %v19
    %v212 = vpop.f32.mrf.mxu0
    %v213 = vadd.f32 0.0, %v212
    %v214 = vpop.f32.mrf.mxu0
    %215 = vmatprep.mubr.f32.mxu0 0.0
    %216 = vmatmul.mubr.f32.gmra.mxu0 %v20
    %v217 = vpop.f32.mrf.mxu0
    %v218 = vadd.f32 0.0, %v217
    %v219 = vpop.f32.mrf.mxu0
    %220 = vmatprep.mubr.f32.mxu0 0.0
    %221 = vmatmul.mubr.f32.gmra.mxu0 %v21
    %v222 = vpop.f32.mrf.mxu0
    %v223 = vadd.f32 0.0, %v222
    %v224 = vpop.f32.mrf.mxu0
    %225 = vmatprep.mubr.f32.mxu0 0.0
    %226 = vmatmul.mubr.f32.gmra.mxu0 %v22
    %v227 = vpop.f32.mrf.mxu0
    %v228 = vadd.f32 0.0, %v227
    %v229 = vpop.f32.mrf.mxu0
    %230 = vmatprep.mubr.f32.mxu0 0.0
    %231 = vmatmul.mubr.f32.gmra.mxu0 %v23
    %v232 = vpop.f32.mrf.mxu0
    %v233 = vadd.f32 0.0, %v232
    %v234 = vpop.f32.mrf.mxu0
    %235 = vmatprep.mubr.f32.mxu0 0.0
    %236 = vmatmul.mubr.f32.gmra.mxu0 %v24
    %v237 = vpop.f32.mrf.mxu0
    %v238 = vadd.f32 0.0, %v237
    %v239 = vpop.f32.mrf.mxu0
    %240 = vmatprep.mubr.f32.mxu0 0.0
    %241 = vmatmul.mubr.f32.gmra.mxu0 %v25
    %v242 = vpop.f32.mrf.mxu0
    %v243 = vadd.f32 0.0, %v242
    %v244 = vpop.f32.mrf.mxu0
    %245 = vmatprep.mubr.f32.mxu0 0.0
    %246 = vmatmul.mubr.f32.gmra.mxu0 %v26
    %v247 = vpop.f32.mrf.mxu0
    %v248 = vadd.f32 0.0, %v247
    %v249 = vpop.f32.mrf.mxu0
    %250 = vmatprep.mubr.f32.mxu0 0.0
    %251 = vmatmul.mubr.f32.gmra.mxu0 %v27
    %v252 = vpop.f32.mrf.mxu0
    %v253 = vadd.f32 0.0, %v252
    %v254 = vpop.f32.mrf.mxu0
    %255 = vdwg.mxu0
    %vm256 = vcmp.ge.f32.partialorder %v178, 0.0
    %vm257 = vcmp.ge.f32.partialorder %v183, 0.0
    %vm258 = vcmp.ge.f32.partialorder %v188, 0.0
    %vm259 = vcmp.ge.f32.partialorder %v193, 0.0
    %vm260 = vcmp.ge.f32.partialorder %v198, 0.0
    %vm261 = vcmp.ge.f32.partialorder %v203, 0.0
    %vm262 = vcmp.ge.f32.partialorder %v208, 0.0
    %vm263 = vcmp.ge.f32.partialorder %v213, 0.0
    %vm264 = vcmp.ge.f32.partialorder %v218, 0.0
    %vm265 = vcmp.ge.f32.partialorder %v223, 0.0
    %vm266 = vcmp.ge.f32.partialorder %v228, 0.0
    %vm267 = vcmp.ge.f32.partialorder %v233, 0.0
    %vm268 = vcmp.ge.f32.partialorder %v238, 0.0
    %vm269 = vcmp.ge.f32.partialorder %v243, 0.0
    %vm270 = vcmp.ge.f32.partialorder %v248, 0.0
    %vm271 = vcmp.ge.f32.partialorder %v253, 0.0
    %v272 = vmul.f32 %v178, 0.01
    %v273 = vmul.f32 %v183, 0.01
    %v274 = vmul.f32 %v188, 0.01
    %v275 = vmul.f32 %v193, 0.01
    %v276 = vmul.f32 %v198, 0.01
    %v277 = vmul.f32 %v203, 0.01
    %v278 = vmul.f32 %v208, 0.01
    %v279 = vmul.f32 %v213, 0.01
    %v280 = vmul.f32 %v218, 0.01
    %v281 = vmul.f32 %v223, 0.01
    %v282 = vmul.f32 %v228, 0.01
    %v283 = vmul.f32 %v233, 0.01
    %v284 = vmul.f32 %v238, 0.01
    %v285 = vmul.f32 %v243, 0.01
    %v286 = vmul.f32 %v248, 0.01
    %v287 = vmul.f32 %v253, 0.01
    %v288 = vsel %vm256, %v178, %v272
    %v289 = vsel %vm257, %v183, %v273
    %v290 = vsel %vm258, %v188, %v274
    %v291 = vsel %vm259, %v193, %v275
    %v292 = vsel %vm260, %v198, %v276
    %v293 = vsel %vm261, %v203, %v277
    %v294 = vsel %vm262, %v208, %v278
    %v295 = vsel %vm263, %v213, %v279
    %v296 = vsel %vm264, %v218, %v280
    %v297 = vsel %vm265, %v223, %v281
    %v298 = vsel %vm266, %v228, %v282
    %v299 = vsel %vm267, %v233, %v283
    %v300 = vsel %vm268, %v238, %v284
    %v301 = vsel %vm269, %v243, %v285
    %v302 = vsel %vm270, %v248, %v286
    %v303 = vsel %vm271, %v253, %v287
    %304 = vmatprep.subr.mxu0 0.0
    %305 = vmatpush1.msra.mxu0 %v62
    %306 = vmatprep.subr.mxu0 0.0
    %307 = vmatpush1.msra.mxu0 %v61
    %308 = vmatprep.subr.mxu0 0.0
    %309 = vmatpush1.msra.mxu0 %v60
    %310 = vmatprep.subr.mxu0 0.0
    %311 = vmatpush1.msra.mxu0 %v59
    %312 = vmatprep.subr.mxu0 0.0
    %313 = vmatpush1.msra.mxu0 %v58
    %314 = vmatprep.subr.mxu0 0.0
    %315 = vmatpush1.msra.mxu0 %v57
    %316 = vmatprep.subr.mxu0 0.0
    %317 = vmatpush1.msra.mxu0 %v56
    %318 = vmatprep.subr.mxu0 0.0
    %319 = vmatpush1.msra.mxu0 %v55
    %320 = vmatprep.subr.mxu0 0.0
    %321 = vmatpush1.msra.mxu0 %v54
    %322 = vmatprep.subr.mxu0 0.0
    %323 = vmatpush1.msra.mxu0 %v53
    %324 = vmatprep.subr.mxu0 0.0
    %325 = vmatpush1.msra.mxu0 %v52
    %326 = vmatprep.subr.mxu0 0.0
    %327 = vmatpush1.msra.mxu0 %v51
    %328 = vmatprep.subr.mxu0 0.0
    %329 = vmatpush1.msra.mxu0 %v50
    %330 = vmatprep.subr.mxu0 0.0
    %331 = vmatpush1.msra.mxu0 %v49
    %332 = vmatprep.subr.mxu0 0.0
    %333 = vmatpush1.msra.mxu0 %v48
    %334 = vmatprep.subr.mxu0 0.0
    %335 = vmatpush1.msra.mxu0 %v47
    %336 = vmatprep.subr.mxu0 0.0
    %337 = vmatpush2.msra.mxu0 0.0
    %338 = vmatprep.subr.mxu0 0.0
    %339 = vmatpush2.msra.mxu0 0.0
    %340 = vmatprep.subr.mxu0 0.0
    %341 = vmatpush2.msra.mxu0 0.0
    %342 = vmatprep.subr.mxu0 0.0
    %343 = vmatpush2.msra.mxu0 0.0
    %344 = vmatprep.subr.mxu0 0.0
    %345 = vmatpush2.msra.mxu0 0.0
    %346 = vmatprep.subr.mxu0 0.0
    %347 = vmatpush2.msra.mxu0 0.0
    %348 = vmatprep.subr.mxu0 0.0
    %349 = vmatpush2.msra.mxu0 0.0
    %350 = vmatprep.subr.mxu0 0.0
    %351 = vmatpush2.msra.mxu0 0.0
    %352 = vmatprep.subr.mxu0 0.0
    %353 = vmatpush2.msra.mxu0 0.0
    %354 = vmatprep.subr.mxu0 0.0
    %355 = vmatpush2.msra.mxu0 0.0
    %356 = vmatprep.subr.mxu0 0.0
    %357 = vmatpush2.msra.mxu0 0.0
    %358 = vmatprep.subr.mxu0 0.0
    %359 = vmatpush2.msra.mxu0 0.0
    %360 = vmatprep.subr.mxu0 0.0
    %361 = vmatpush2.msra.mxu0 0.0
    %362 = vmatprep.subr.mxu0 0.0
    %363 = vmatpush2.msra.mxu0 0.0
    %364 = vmatprep.subr.mxu0 0.0
    %365 = vmatpush2.msra.mxu0 0.0
    %366 = vmatprep.subr.mxu0 0.0
    %367 = vmatpush2.msra.mxu0 0.0
    %368 = vmatprep.mubr.f32.mxu0 0.0
    %369 = vmatmul.mubr.f32.gmra.mxu0 %v28
    %v370 = vpop.f32.mrf.mxu0
    %v371 = vadd.f32 0.0, %v370
    %v372 = vpop.f32.mrf.mxu0
    %373 = vdwg.mxu0
    %374 = vmatprep.subr.mxu0 0.0
    %375 = vmatpush1.msra.mxu0 %v78
    %376 = vmatprep.subr.mxu0 0.0
    %377 = vmatpush1.msra.mxu0 %v77
    %378 = vmatprep.subr.mxu0 0.0
    %379 = vmatpush1.msra.mxu0 %v76
    %380 = vmatprep.subr.mxu0 0.0
    %381 = vmatpush1.msra.mxu0 %v75
    %382 = vmatprep.subr.mxu0 0.0
    %383 = vmatpush1.msra.mxu0 %v74
    %384 = vmatprep.subr.mxu0 0.0
    %385 = vmatpush1.msra.mxu0 %v73
    %386 = vmatprep.subr.mxu0 0.0
    %387 = vmatpush1.msra.mxu0 %v72
    %388 = vmatprep.subr.mxu0 0.0
    %389 = vmatpush1.msra.mxu0 %v71
    %390 = vmatprep.subr.mxu0 0.0
    %391 = vmatpush1.msra.mxu0 %v70
    %392 = vmatprep.subr.mxu0 0.0
    %393 = vmatpush1.msra.mxu0 %v69
    %394 = vmatprep.subr.mxu0 0.0
    %395 = vmatpush1.msra.mxu0 %v68
    %396 = vmatprep.subr.mxu0 0.0
    %397 = vmatpush1.msra.mxu0 %v67
    %398 = vmatprep.subr.mxu0 0.0
    %399 = vmatpush1.msra.mxu0 %v66
    %400 = vmatprep.subr.mxu0 0.0
    %401 = vmatpush1.msra.mxu0 %v65
    %402 = vmatprep.subr.mxu0 0.0
    %403 = vmatpush1.msra.mxu0 %v64
    %404 = vmatprep.subr.mxu0 0.0
    %405 = vmatpush1.msra.mxu0 %v63
    %406 = vmatprep.subr.mxu0 0.0
    %407 = vmatpush2.msra.mxu0 0.0
    %408 = vmatprep.subr.mxu0 0.0
    %409 = vmatpush2.msra.mxu0 0.0
    %410 = vmatprep.subr.mxu0 0.0
    %411 = vmatpush2.msra.mxu0 0.0
    %412 = vmatprep.subr.mxu0 0.0
    %413 = vmatpush2.msra.mxu0 0.0
    %414 = vmatprep.subr.mxu0 0.0
    %415 = vmatpush2.msra.mxu0 0.0
    %416 = vmatprep.subr.mxu0 0.0
    %417 = vmatpush2.msra.mxu0 0.0
    %418 = vmatprep.subr.mxu0 0.0
    %419 = vmatpush2.msra.mxu0 0.0
    %420 = vmatprep.subr.mxu0 0.0
    %421 = vmatpush2.msra.mxu0 0.0
    %422 = vmatprep.subr.mxu0 0.0
    %423 = vmatpush2.msra.mxu0 0.0
    %424 = vmatprep.subr.mxu0 0.0
    %425 = vmatpush2.msra.mxu0 0.0
    %426 = vmatprep.subr.mxu0 0.0
    %427 = vmatpush2.msra.mxu0 0.0
    %428 = vmatprep.subr.mxu0 0.0
    %429 = vmatpush2.msra.mxu0 0.0
    %430 = vmatprep.subr.mxu0 0.0
    %431 = vmatpush2.msra.mxu0 0.0
    %432 = vmatprep.subr.mxu0 0.0
    %433 = vmatpush2.msra.mxu0 0.0
    %434 = vmatprep.subr.mxu0 0.0
    %435 = vmatpush2.msra.mxu0 0.0
    %436 = vmatprep.subr.mxu0 0.0
    %437 = vmatpush2.msra.mxu0 0.0
    %438 = vmatprep.mubr.f32.mxu0 0.0
    %439 = vmatmul.mubr.f32.gmra.mxu0 %v28
    %v440 = vpop.f32.mrf.mxu0
    %v441 = vadd.f32 0.0, %v440
    %v442 = vpop.f32.mrf.mxu0
    %443 = vdwg.mxu0
    %v444 = vmul.f32 %v371, %v371
    %v445 = vmul.f32 %v441, %v441
    %v446 = vadd.f32 %v444, %v445
    %v447 = vrsqrt.pop %v446
    %v448 = vmul.f32 %v446, %v447
    %vm449 = vcmp.eq.f32.partialorder %v446, inf
    %v450 = vsel %vm449, %v446, %v448
    %vm451 = vcmp.eq.f32.partialorder %v446, 0.0
    %v452 = vand.u32 %v446, 2147483648
    %v453 = vsel %vm451, %v452, %v450
    %454 = vmatprep.subr.mxu0 0.0
    %455 = vmatpush1.msra.mxu0 %v94
    %456 = vmatprep.subr.mxu0 0.0
    %457 = vmatpush1.msra.mxu0 %v93
    %458 = vmatprep.subr.mxu0 0.0
    %459 = vmatpush1.msra.mxu0 %v92
    %460 = vmatprep.subr.mxu0 0.0
    %461 = vmatpush1.msra.mxu0 %v91
    %462 = vmatprep.subr.mxu0 0.0
    %463 = vmatpush1.msra.mxu0 %v90
    %464 = vmatprep.subr.mxu0 0.0
    %465 = vmatpush1.msra.mxu0 %v89
    %466 = vmatprep.subr.mxu0 0.0
    %467 = vmatpush1.msra.mxu0 %v88
    %468 = vmatprep.subr.mxu0 0.0
    %469 = vmatpush1.msra.mxu0 %v87
    %470 = vmatprep.subr.mxu0 0.0
    %471 = vmatpush1.msra.mxu0 %v86
    %472 = vmatprep.subr.mxu0 0.0
    %473 = vmatpush1.msra.mxu0 %v85
    %474 = vmatprep.subr.mxu0 0.0
    %475 = vmatpush1.msra.mxu0 %v84
    %476 = vmatprep.subr.mxu0 0.0
    %477 = vmatpush1.msra.mxu0 %v83
    %478 = vmatprep.subr.mxu0 0.0
    %479 = vmatpush1.msra.mxu0 %v82
    %480 = vmatprep.subr.mxu0 0.0
    %481 = vmatpush1.msra.mxu0 %v81
    %482 = vmatprep.subr.mxu0 0.0
    %483 = vmatpush1.msra.mxu0 %v80
    %484 = vmatprep.subr.mxu0 0.0
    %485 = vmatpush1.msra.mxu0 %v79
    %486 = vmatprep.subr.mxu0 0.0
    %487 = vmatpush2.msra.mxu0 0.0
    %488 = vmatprep.subr.mxu0 0.0
    %489 = vmatpush2.msra.mxu0 0.0
    %490 = vmatprep.subr.mxu0 0.0
    %491 = vmatpush2.msra.mxu0 0.0
    %492 = vmatprep.subr.mxu0 0.0
    %493 = vmatpush2.msra.mxu0 0.0
    %494 = vmatprep.subr.mxu0 0.0
    %495 = vmatpush2.msra.mxu0 0.0
    %496 = vmatprep.subr.mxu0 0.0
    %497 = vmatpush2.msra.mxu0 0.0
    %498 = vmatprep.subr.mxu0 0.0
    %499 = vmatpush2.msra.mxu0 0.0
    %500 = vmatprep.subr.mxu0 0.0
    %501 = vmatpush2.msra.mxu0 0.0
    %502 = vmatprep.subr.mxu0 0.0
    %503 = vmatpush2.msra.mxu0 0.0
    %504 = vmatprep.subr.mxu0 0.0
    %505 = vmatpush2.msra.mxu0 0.0
    %506 = vmatprep.subr.mxu0 0.0
    %507 = vmatpush2.msra.mxu0 0.0
    %508 = vmatprep.subr.mxu0 0.0
    %509 = vmatpush2.msra.mxu0 0.0
    %510 = vmatprep.subr.mxu0 0.0
    %511 = vmatpush2.msra.mxu0 0.0
    %512 = vmatprep.subr.mxu0 0.0
    %513 = vmatpush2.msra.mxu0 0.0
    %514 = vmatprep.subr.mxu0 0.0
    %515 = vmatpush2.msra.mxu0 0.0
    %516 = vmatprep.subr.mxu0 0.0
    %517 = vmatpush2.msra.mxu0 0.0
    %518 = vmatprep.mubr.f32.mxu0 0.0
    %519 = vmatmul.mubr.f32.gmra.mxu0 %v453
    %v520 = vpop.f32.mrf.mxu0
    %v521 = vadd.f32 0.0, %v520
    %v522 = vpop.f32.mrf.mxu0
    %523 = vdwg.mxu0
    %524 = vmatprep.subr.mxu0 0.0
    %525 = vmatpush1.msra.mxu0 %v303
    %526 = vmatprep.subr.mxu0 0.0
    %527 = vmatpush1.msra.mxu0 %v302
    %528 = vmatprep.subr.mxu0 0.0
    %529 = vmatpush1.msra.mxu0 %v301
    %530 = vmatprep.subr.mxu0 0.0
    %531 = vmatpush1.msra.mxu0 %v300
    %532 = vmatprep.subr.mxu0 0.0
    %533 = vmatpush1.msra.mxu0 %v299
    %534 = vmatprep.subr.mxu0 0.0
    %535 = vmatpush1.msra.mxu0 %v298
    %536 = vmatprep.subr.mxu0 0.0
    %537 = vmatpush1.msra.mxu0 %v297
    %538 = vmatprep.subr.mxu0 0.0
    %539 = vmatpush1.msra.mxu0 %v296
    %540 = vmatprep.subr.mxu0 0.0
    %541 = vmatpush1.msra.mxu0 %v295
    %542 = vmatprep.subr.mxu0 0.0
    %543 = vmatpush1.msra.mxu0 %v294
    %544 = vmatprep.subr.mxu0 0.0
    %545 = vmatpush1.msra.mxu0 %v293
    %546 = vmatprep.subr.mxu0 0.0
    %547 = vmatpush1.msra.mxu0 %v292
    %548 = vmatprep.subr.mxu0 0.0
    %549 = vmatpush1.msra.mxu0 %v291
    %550 = vmatprep.subr.mxu0 0.0
    %551 = vmatpush1.msra.mxu0 %v290
    %552 = vmatprep.subr.mxu0 0.0
    %553 = vmatpush1.msra.mxu0 %v289
    %554 = vmatprep.subr.mxu0 0.0
    %555 = vmatpush1.msra.mxu0 %v288
    %556 = vmatprep.subr.mxu0 0.0
    %557 = vmatpush2.msra.mxu0 0.0
    %558 = vmatprep.subr.mxu0 0.0
    %559 = vmatpush2.msra.mxu0 0.0
    %560 = vmatprep.subr.mxu0 0.0
    %561 = vmatpush2.msra.mxu0 0.0
    %562 = vmatprep.subr.mxu0 0.0
    %563 = vmatpush2.msra.mxu0 0.0
    %564 = vmatprep.subr.mxu0 0.0
    %565 = vmatpush2.msra.mxu0 0.0
    %566 = vmatprep.subr.mxu0 0.0
    %567 = vmatpush2.msra.mxu0 0.0
    %568 = vmatprep.subr.mxu0 0.0
    %569 = vmatpush2.msra.mxu0 0.0
    %570 = vmatprep.subr.mxu0 0.0
    %571 = vmatpush2.msra.mxu0 0.0
    %572 = vmatprep.subr.mxu0 0.0
    %573 = vmatpush2.msra.mxu0 0.0
    %574 = vmatprep.subr.mxu0 0.0
    %575 = vmatpush2.msra.mxu0 0.0
    %576 = vmatprep.subr.mxu0 0.0
    %577 = vmatpush2.msra.mxu0 0.0
    %578 = vmatprep.subr.mxu0 0.0
    %579 = vmatpush2.msra.mxu0 0.0
    %580 = vmatprep.subr.mxu0 0.0
    %581 = vmatpush2.msra.mxu0 0.0
    %582 = vmatprep.subr.mxu0 0.0
    %583 = vmatpush2.msra.mxu0 0.0
    %584 = vmatprep.subr.mxu0 0.0
    %585 = vmatpush2.msra.mxu0 0.0
    %586 = vmatprep.subr.mxu0 0.0
    %587 = vmatpush2.msra.mxu0 0.0
    %588 = vmatprep.mubr.f32.mxu0 0.0
    %589 = vmatmul.mubr.f32.gmra.mxu0 %v46
    %v590 = vpop.f32.mrf.mxu0
    %v591 = vadd.f32 %v521, %v590
    %v592 = vpop.f32.mrf.mxu0
    %593 = vdwg.mxu0
    %v594 = vadd.f32 %v591, %v29
    %595 = vmatprep.subr.mxu0 0.0
    %596 = vmatpush1.msra.mxu0 %v110
    %597 = vmatprep.subr.mxu0 0.0
    %598 = vmatpush1.msra.mxu0 %v109
    %599 = vmatprep.subr.mxu0 0.0
    %600 = vmatpush1.msra.mxu0 %v108
    %601 = vmatprep.subr.mxu0 0.0
    %602 = vmatpush1.msra.mxu0 %v107
    %603 = vmatprep.subr.mxu0 0.0
    %604 = vmatpush1.msra.mxu0 %v106
    %605 = vmatprep.subr.mxu0 0.0
    %606 = vmatpush1.msra.mxu0 %v105
    %607 = vmatprep.subr.mxu0 0.0
    %608 = vmatpush1.msra.mxu0 %v104
    %609 = vmatprep.subr.mxu0 0.0
    %610 = vmatpush1.msra.mxu0 %v103
    %611 = vmatprep.subr.mxu0 0.0
    %612 = vmatpush1.msra.mxu0 %v102
    %613 = vmatprep.subr.mxu0 0.0
    %614 = vmatpush1.msra.mxu0 %v101
    %615 = vmatprep.subr.mxu0 0.0
    %616 = vmatpush1.msra.mxu0 %v100
    %617 = vmatprep.subr.mxu0 0.0
    %618 = vmatpush1.msra.mxu0 %v99
    %619 = vmatprep.subr.mxu0 0.0
    %620 = vmatpush1.msra.mxu0 %v98
    %621 = vmatprep.subr.mxu0 0.0
    %622 = vmatpush1.msra.mxu0 %v97
    %623 = vmatprep.subr.mxu0 0.0
    %624 = vmatpush1.msra.mxu0 %v96
    %625 = vmatprep.subr.mxu0 0.0
    %626 = vmatpush1.msra.mxu0 %v95
    %627 = vmatprep.subr.mxu0 0.0
    %628 = vmatpush2.msra.mxu0 0.0
    %629 = vmatprep.subr.mxu0 0.0
    %630 = vmatpush2.msra.mxu0 0.0
    %631 = vmatprep.subr.mxu0 0.0
    %632 = vmatpush2.msra.mxu0 0.0
    %633 = vmatprep.subr.mxu0 0.0
    %634 = vmatpush2.msra.mxu0 0.0
    %635 = vmatprep.subr.mxu0 0.0
    %636 = vmatpush2.msra.mxu0 0.0
    %637 = vmatprep.subr.mxu0 0.0
    %638 = vmatpush2.msra.mxu0 0.0
    %639 = vmatprep.subr.mxu0 0.0
    %640 = vmatpush2.msra.mxu0 0.0
    %641 = vmatprep.subr.mxu0 0.0
    %642 = vmatpush2.msra.mxu0 0.0
    %643 = vmatprep.subr.mxu0 0.0
    %644 = vmatpush2.msra.mxu0 0.0
    %645 = vmatprep.subr.mxu0 0.0
    %646 = vmatpush2.msra.mxu0 0.0
    %647 = vmatprep.subr.mxu0 0.0
    %648 = vmatpush2.msra.mxu0 0.0
    %649 = vmatprep.subr.mxu0 0.0
    %650 = vmatpush2.msra.mxu0 0.0
    %651 = vmatprep.subr.mxu0 0.0
    %652 = vmatpush2.msra.mxu0 0.0
    %653 = vmatprep.subr.mxu0 0.0
    %654 = vmatpush2.msra.mxu0 0.0
    %655 = vmatprep.subr.mxu0 0.0
    %656 = vmatpush2.msra.mxu0 0.0
    %657 = vmatprep.subr.mxu0 0.0
    %658 = vmatpush2.msra.mxu0 0.0
    %659 = vmatprep.mubr.f32.mxu0 0.0
    %660 = vmatmul.mubr.f32.gmra.mxu0 %v594
    %v661 = vpop.f32.mrf.mxu0
    %v662 = vadd.f32 0.0, %v661
    %v663 = vpop.f32.mrf.mxu0
    %664 = vdwg.mxu0
    %665 = vst [vmem:[#allocation2] sm:$0xff] %v662
    // Predicated region
    $region10: #{forward.1} parent=1 // pred_check
      _
    $region11: #{forward.1} parent=1 // pred_check_branch
      %667 = sbr.rel (0) target = $region13
    $region12: #{forward.1} parent=1 // pred_region
      %s669 = ssub.s32 128, 128
      %670 = vsyncadd [#allocation3], %s669
      %s672 = sshll.u32 [#allocation2], 4
      %s673 = int_to_ptr.vmem [resolvable:$true] %s672
      %675 = dma.vmem_to_hbm [thread:$0]  %s673, 128, %s2, [#allocation3]
    $region13: #{forward.1} parent=1 // pred_fallthru
      _
    // Predicated region
    $region14: #{forward.1} parent=1 // pred_check
      _
    $region15: #{forward.1} parent=1 // pred_check_branch
      %677 = sbr.rel (0) target = $region17
    $region16: #{forward.1} parent=1 // pred_region
      %678 = dma.done [#allocation3], 128
    $region17: #{forward.1} parent=1 // pred_fallthru
      _
    %679 = vsyncpa [#allocation3], 1

</llo_original>
